<compile_context>
chip_gen: v7x
topology: tpu7x:2x2x1
jax: 0.10.0
libtpu: 0.0.40
codegen_flags: <defaults>
</compile_context>

<pallas_src>
import functools

import jax
import jax.numpy as jnp
from jax.experimental import pallas as pl
from jax.experimental.pallas import tpu as pltpu


def conv1x1_relu_kernel(x_ref, wb_ref, o_ref, *, n_batch, cin, cout):
    # x_ref : (N*Cin,  TL)   -- batch folded into sublanes, spatial tile on lanes
    # wb_ref: (Cout, Cin+1)  -- weights with bias fused as the last column
    # o_ref : (N*Cout, TL)
    x = x_ref[...].astype(jnp.float32)          # cast hoisted (no-op for f32)
    wb = wb_ref[...].astype(jnp.float32)
    w = wb[:, :cin]                             # (Cout, Cin)
    b = wb[:, cin:cin + 1]                      # (Cout, 1) broadcast over lanes
    tl = x.shape[1]

    # Only use the MXU when it would actually be occupied; otherwise the
    # unrolled VPU outer-product is free in this memory-bound kernel.
    use_mxu = (cin >= 32) and (cout >= 64)

    for n in range(n_batch):                    # static unroll over batch slices
        xn = x[n * cin:(n + 1) * cin, :]        # (Cin, TL), static slice
        if use_mxu:
            acc = jnp.dot(w, xn, preferred_element_type=jnp.float32)
        else:
            # Two independent partial sums break the serial FMA dependency chain.
            acc0 = jnp.zeros((cout, tl), jnp.float32)
            acc1 = jnp.zeros((cout, tl), jnp.float32)
            for ci in range(cin):               # static unroll, Cin is tiny
                term = w[:, ci:ci + 1] * xn[ci:ci + 1, :]
                if ci % 2 == 0:
                    acc0 = acc0 + term
                else:
                    acc1 = acc1 + term
            acc = acc0 + acc1
        o_ref[n * cout:(n + 1) * cout, :] = jnp.maximum(acc + b, 0.0).astype(o_ref.dtype)


def _pick_spatial_tile(hw, bytes_per_lane, *, max_tile=32768, vmem_budget=12 * 1024 * 1024):
    """Pick a lane-dense spatial tile bounded by a VMEM working-set budget.

    bytes_per_lane: double-buffered x+out bytes per spatial lane.
    """
    if hw <= max_tile and hw * bytes_per_lane <= vmem_budget:
        # Whole spatial extent in one tile (single grid step). Full-extent
        # blocks satisfy the (8,128) rule even when hw % 128 != 0.
        return hw
    cap = min(max_tile, vmem_budget // bytes_per_lane)
    tl = max(128, (cap // 128) * 128)
    if hw % 128 == 0:
        # Prefer a divisor of hw so every tile gets an unmasked store.
        while hw % tl != 0 and tl > 128:
            tl -= 128
    return tl


def conv_relu(x_nchw, weight, bias, *, max_tile=32768, vmem_budget=12 * 1024 * 1024):
    """x_nchw: (N, Cin, H, W); weight: (Cout, Cin, 1, 1); bias: (Cout,)."""
    N, Cin, H, W = x_nchw.shape
    Cout = weight.shape[0]
    HW = H * W
    itemsize = jnp.dtype(x_nchw.dtype).itemsize

    # Contiguous reshapes only (no transposes, no extra HBM traffic).
    x_rows = x_nchw.reshape(N * Cin, HW)
    wb = jnp.concatenate(
        [weight.reshape(Cout, Cin), bias.reshape(Cout, 1)], axis=1
    ).astype(x_nchw.dtype)

    rows_in = N * Cin
    rows_out = N * Cout
    # Double-buffered x tile + out tile per spatial lane.
    bytes_per_lane = 2 * (rows_in + rows_out) * itemsize
    TL = _pick_spatial_tile(HW, bytes_per_lane, max_tile=max_tile, vmem_budget=vmem_budget)
    grid = (pl.cdiv(HW, TL),)

    flops = 2 * N * HW * Cin * Cout
    bytes_accessed = itemsize * (rows_in * HW + Cout * (Cin + 1) + rows_out * HW)

    kernel = functools.partial(conv1x1_relu_kernel, n_batch=N, cin=Cin, cout=Cout)

    out = pl.pallas_call(
        kernel,
        out_shape=jax.ShapeDtypeStruct((rows_out, HW), x_nchw.dtype),
        grid=grid,
        in_specs=[
            # x: spatial tile l along the lane axis, batch*channels on sublanes.
            pl.BlockSpec((rows_in, TL), lambda l: (0, l)),
            # fused weight+bias: loaded once, resident in VMEM across the grid.
            pl.BlockSpec((Cout, Cin + 1), lambda l: (0, 0)),
        ],
        out_specs=pl.BlockSpec((rows_out, TL), lambda l: (0, l)),
        compiler_params=pltpu.CompilerParams(
            dimension_semantics=("parallel",),
            vmem_limit_bytes=32 * 1024 * 1024,
        ),
        cost_estimate=pl.CostEstimate(
            flops=flops, transcendentals=0, bytes_accessed=bytes_accessed),
    )(x_rows, wb)

    return out.reshape(N, Cout, H, W)


if __name__ == "__main__":
    key = jax.random.PRNGKey(0)
    k_x, k_w, k_b = jax.random.split(key, 3)

    # Module: ConvReLU(indim=4, outdim=8); input NCHW (2, 4, 16, 16)
    N, Cin, H, W = 2, 4, 16, 16
    Cout = 8

    x = jax.random.normal(k_x, (N, Cin, H, W), dtype=jnp.float32)
    # Deterministic parameter init (matches nn.Conv2d parameter shapes)
    weight = jax.random.normal(k_w, (Cout, Cin, 1, 1), dtype=jnp.float32) * 0.1
    bias = jax.random.normal(k_b, (Cout,), dtype=jnp.float32) * 0.1

    out = conv_relu(x, weight, bias)
    jax.block_until_ready(out)

    # Reference check (pure JAX) for sanity
    ref = jnp.einsum("nchw,oc->nohw", x, weight.reshape(Cout, Cin))
    ref = jnp.maximum(ref + bias[None, :, None, None], 0.0)
    assert out.shape == (N, Cout, H, W)
    assert jnp.allclose(out, ref, atol=1e-5, rtol=1e-5)

    print("KERNEL_OK")
</pallas_src>

<mosaic_0001>
module attributes {stable_mosaic.version = 11 : i64} {
  func.func @conv1x1_relu_kernel(%arg0: i32, %arg1: memref<8x256xf32, #tpu.memory_space<vmem>>, %arg2: memref<8x5xf32, #tpu.memory_space<vmem>>, %arg3: memref<16x256xf32, #tpu.memory_space<vmem>>) attributes {dimension_semantics = [#tpu.dimension_semantics<parallel>], iteration_bounds = array<i64: 1>, scalar_prefetch = 0 : i64, scratch_operands = 0 : i64, tpu.core_type = #tpu.core_type<tc>, window_params = [{transform_indices = @transform_0, window_bounds = array<i64: 8, 256>}, {pipeline_mode = #tpu.pipeline_mode<synchronous>, transform_indices = @transform_1, window_bounds = array<i64: 8, 5>}, {transform_indices = @transform_2, window_bounds = array<i64: 16, 256>}]} {
    %c0 = arith.constant 0 : index
    %c0_0 = arith.constant 0 : index
    %0 = vector.load %arg1[%c0, %c0_0] : memref<8x256xf32, #tpu.memory_space<vmem>>, vector<8x256xf32>
    %c0_1 = arith.constant 0 : index
    %c0_2 = arith.constant 0 : index
    %1 = vector.load %arg2[%c0_1, %c0_2] : memref<8x5xf32, #tpu.memory_space<vmem>>, vector<8x5xf32>
    %2 = vector.extract_strided_slice %1 {offsets = [0, 0], sizes = [8, 4], strides = [1, 1]} : vector<8x5xf32> to vector<8x4xf32>
    %3 = vector.extract_strided_slice %1 {offsets = [0, 4], sizes = [8, 1], strides = [1, 1]} : vector<8x5xf32> to vector<8x1xf32>
    %4 = vector.extract_strided_slice %0 {offsets = [0, 0], sizes = [4, 256], strides = [1, 1]} : vector<8x256xf32> to vector<4x256xf32>
    %cst = arith.constant 0.000000e+00 : f32
    %5 = vector.broadcast %cst : f32 to vector<8x256xf32>
    %cst_3 = arith.constant 0.000000e+00 : f32
    %6 = vector.broadcast %cst_3 : f32 to vector<8x256xf32>
    %7 = vector.extract_strided_slice %2 {offsets = [0, 0], sizes = [8, 1], strides = [1, 1]} : vector<8x4xf32> to vector<8x1xf32>
    %8 = vector.extract_strided_slice %4 {offsets = [0, 0], sizes = [1, 256], strides = [1, 1]} : vector<4x256xf32> to vector<1x256xf32>
    %9 = vector.broadcast %7 : vector<8x1xf32> to vector<8x256xf32>
    %10 = vector.broadcast %8 : vector<1x256xf32> to vector<8x256xf32>
    %11 = arith.mulf %9, %10 : vector<8x256xf32>
    %12 = arith.addf %5, %11 : vector<8x256xf32>
    %13 = vector.extract_strided_slice %2 {offsets = [0, 1], sizes = [8, 1], strides = [1, 1]} : vector<8x4xf32> to vector<8x1xf32>
    %14 = vector.extract_strided_slice %4 {offsets = [1, 0], sizes = [1, 256], strides = [1, 1]} : vector<4x256xf32> to vector<1x256xf32>
    %15 = vector.broadcast %13 : vector<8x1xf32> to vector<8x256xf32>
    %16 = vector.broadcast %14 : vector<1x256xf32> to vector<8x256xf32>
    %17 = arith.mulf %15, %16 : vector<8x256xf32>
    %18 = arith.addf %6, %17 : vector<8x256xf32>
    %19 = vector.extract_strided_slice %2 {offsets = [0, 2], sizes = [8, 1], strides = [1, 1]} : vector<8x4xf32> to vector<8x1xf32>
    %20 = vector.extract_strided_slice %4 {offsets = [2, 0], sizes = [1, 256], strides = [1, 1]} : vector<4x256xf32> to vector<1x256xf32>
    %21 = vector.broadcast %19 : vector<8x1xf32> to vector<8x256xf32>
    %22 = vector.broadcast %20 : vector<1x256xf32> to vector<8x256xf32>
    %23 = arith.mulf %21, %22 : vector<8x256xf32>
    %24 = arith.addf %12, %23 : vector<8x256xf32>
    %25 = vector.extract_strided_slice %2 {offsets = [0, 3], sizes = [8, 1], strides = [1, 1]} : vector<8x4xf32> to vector<8x1xf32>
    %26 = vector.extract_strided_slice %4 {offsets = [3, 0], sizes = [1, 256], strides = [1, 1]} : vector<4x256xf32> to vector<1x256xf32>
    %27 = vector.broadcast %25 : vector<8x1xf32> to vector<8x256xf32>
    %28 = vector.broadcast %26 : vector<1x256xf32> to vector<8x256xf32>
    %29 = arith.mulf %27, %28 : vector<8x256xf32>
    %30 = arith.addf %18, %29 : vector<8x256xf32>
    %31 = arith.addf %24, %30 : vector<8x256xf32>
    %32 = vector.broadcast %3 : vector<8x1xf32> to vector<8x256xf32>
    %33 = arith.addf %31, %32 : vector<8x256xf32>
    %cst_4 = arith.constant 0.000000e+00 : f32
    %34 = vector.broadcast %cst_4 : f32 to vector<8x256xf32>
    %35 = arith.maximumf %33, %34 : vector<8x256xf32>
    %c0_5 = arith.constant 0 : index
    %c0_6 = arith.constant 0 : index
    %36 = vector.load %arg3[%c0_5, %c0_6] : memref<16x256xf32, #tpu.memory_space<vmem>>, vector<8x256xf32>
    tpu.vector_store %arg3[%c0_5, %c0_6], %35 {strides = array<i32>} : memref<16x256xf32, #tpu.memory_space<vmem>>, vector<8x256xf32>,
    %37 = vector.extract_strided_slice %0 {offsets = [4, 0], sizes = [4, 256], strides = [1, 1]} : vector<8x256xf32> to vector<4x256xf32>
    %cst_7 = arith.constant 0.000000e+00 : f32
    %38 = vector.broadcast %cst_7 : f32 to vector<8x256xf32>
    %cst_8 = arith.constant 0.000000e+00 : f32
    %39 = vector.broadcast %cst_8 : f32 to vector<8x256xf32>
    %40 = vector.extract_strided_slice %2 {offsets = [0, 0], sizes = [8, 1], strides = [1, 1]} : vector<8x4xf32> to vector<8x1xf32>
    %41 = vector.extract_strided_slice %37 {offsets = [0, 0], sizes = [1, 256], strides = [1, 1]} : vector<4x256xf32> to vector<1x256xf32>
    %42 = vector.broadcast %40 : vector<8x1xf32> to vector<8x256xf32>
    %43 = vector.broadcast %41 : vector<1x256xf32> to vector<8x256xf32>
    %44 = arith.mulf %42, %43 : vector<8x256xf32>
    %45 = arith.addf %38, %44 : vector<8x256xf32>
    %46 = vector.extract_strided_slice %2 {offsets = [0, 1], sizes = [8, 1], strides = [1, 1]} : vector<8x4xf32> to vector<8x1xf32>
    %47 = vector.extract_strided_slice %37 {offsets = [1, 0], sizes = [1, 256], strides = [1, 1]} : vector<4x256xf32> to vector<1x256xf32>
    %48 = vector.broadcast %46 : vector<8x1xf32> to vector<8x256xf32>
    %49 = vector.broadcast %47 : vector<1x256xf32> to vector<8x256xf32>
    %50 = arith.mulf %48, %49 : vector<8x256xf32>
    %51 = arith.addf %39, %50 : vector<8x256xf32>
    %52 = vector.extract_strided_slice %2 {offsets = [0, 2], sizes = [8, 1], strides = [1, 1]} : vector<8x4xf32> to vector<8x1xf32>
    %53 = vector.extract_strided_slice %37 {offsets = [2, 0], sizes = [1, 256], strides = [1, 1]} : vector<4x256xf32> to vector<1x256xf32>
    %54 = vector.broadcast %52 : vector<8x1xf32> to vector<8x256xf32>
    %55 = vector.broadcast %53 : vector<1x256xf32> to vector<8x256xf32>
    %56 = arith.mulf %54, %55 : vector<8x256xf32>
    %57 = arith.addf %45, %56 : vector<8x256xf32>
    %58 = vector.extract_strided_slice %2 {offsets = [0, 3], sizes = [8, 1], strides = [1, 1]} : vector<8x4xf32> to vector<8x1xf32>
    %59 = vector.extract_strided_slice %37 {offsets = [3, 0], sizes = [1, 256], strides = [1, 1]} : vector<4x256xf32> to vector<1x256xf32>
    %60 = vector.broadcast %58 : vector<8x1xf32> to vector<8x256xf32>
    %61 = vector.broadcast %59 : vector<1x256xf32> to vector<8x256xf32>
    %62 = arith.mulf %60, %61 : vector<8x256xf32>
    %63 = arith.addf %51, %62 : vector<8x256xf32>
    %64 = arith.addf %57, %63 : vector<8x256xf32>
    %65 = vector.broadcast %3 : vector<8x1xf32> to vector<8x256xf32>
    %66 = arith.addf %64, %65 : vector<8x256xf32>
    %cst_9 = arith.constant 0.000000e+00 : f32
    %67 = vector.broadcast %cst_9 : f32 to vector<8x256xf32>
    %68 = arith.maximumf %66, %67 : vector<8x256xf32>
    %c8 = arith.constant 8 : index
    %c0_10 = arith.constant 0 : index
    %69 = vector.load %arg3[%c8, %c0_10] : memref<16x256xf32, #tpu.memory_space<vmem>>, vector<8x256xf32>
    tpu.vector_store %arg3[%c8, %c0_10], %68 {strides = array<i32>} : memref<16x256xf32, #tpu.memory_space<vmem>>, vector<8x256xf32>,
    return
  }
  func.func @transform_0(%arg0: i32) -> (i32, i32) {
    %c0_i32 = arith.constant 0 : i32
    %c0_i32_0 = arith.constant 0 : i32
    return %c0_i32, %arg0 : i32, i32
  }
  func.func @transform_1(%arg0: i32) -> (i32, i32) {
    %c0_i32 = arith.constant 0 : i32
    %c0_i32_0 = arith.constant 0 : i32
    %c0_i32_1 = arith.constant 0 : i32
    return %c0_i32, %c0_i32_0 : i32, i32
  }
  func.func @transform_2(%arg0: i32) -> (i32, i32) {
    %c0_i32 = arith.constant 0 : i32
    %c0_i32_0 = arith.constant 0 : i32
    return %c0_i32, %arg0 : i32, i32
  }
}

</mosaic_0001>

<llo_original>
// kernel: tpu_custom_call.1
$region0: #{tpu_custom_call.1}
  #allocation0 [shape = 'u32[]', space=smem, size = 0x4, offset = 0x4, fixed_abs, tag = 'smem constant byte address 0x4 - core index']
  #allocation1 [shape = 'u32[144,128]{1,0:T(1,128)}', space=vmem, size = 0x12000, scoped, tag = 'internal scratch']
  %s0 = inlined_call_operand.hbm [shape: f32[8,256], index: 0, kind: input, shape index: {}]
  %s1 = inlined_call_operand.hbm [shape: f32[8,5], index: 1, kind: input, shape index: {}]
  %s2 = inlined_call_operand.hbm [shape: f32[16,256], index: 2, kind: output, shape index: {}]
  %s3 = sld [smem:[#allocation0]]
  $region26: #{tpu_custom_call.1} parent=0
    _
  %s5 = ssub.s32 1, %s3
  %s6 = scalar_select 0, %s5, %s3
  $region1: #{tpu_custom_call.1} parent=0
    #allocation2 [shape = 'u8[8192]{0}', space=vmem, size = 0x2000, scoped, tag = 'input window, operand 0, single buffered']
    #allocation3 [shape = 's32[1]{0}', space=sflag, size = 0x4, scoped, tag = 'scoped memory for tpu_custom_call.1']
    #allocation4 [shape = 's32[1]{0}', space=sflag, size = 0x4, scoped, tag = 'scoped memory for tpu_custom_call.1']
    #allocation5 [shape = 'u8[4096]{0}', space=vmem, size = 0x1000, scoped, tag = 'input window, operand 1, single buffered']
    #allocation6 [shape = 's32[1]{0}', space=sflag, size = 0x4, scoped, tag = 'scoped memory for tpu_custom_call.1']
    #allocation7 [shape = 'u8[16384]{0}', space=vmem, size = 0x4000, scoped, tag = 'output window, operand 0, single buffered']
    %7 = vsyncpa [#allocation3], 0
    %8 = vsyncpa [#allocation6], 0
    %9 = vsyncpa [#allocation4], 0
    // Predicated region
    $region2: #{tpu_custom_call.1} parent=1 // pred_check
      _
    $region3: #{tpu_custom_call.1} parent=1 // pred_check_branch
      %11 = sbr.rel (0) target = $region5
    $region4: #{tpu_custom_call.1} parent=1 // pred_region
      %s13 = ssub.s32 256, 256
      %14 = vsyncadd [#allocation3], %s13
      %s16 = sshll.u32 [#allocation2], 4
      %s17 = int_to_ptr.vmem [resolvable:$true] %s16
      %19 = dma.hbm_to_vmem [thread:$0]  %s0, 256, %s17, [#allocation3]
    $region5: #{tpu_custom_call.1} parent=1 // pred_fallthru
      _
    // Predicated region
    $region6: #{tpu_custom_call.1} parent=1 // pred_check
      _
    $region7: #{tpu_custom_call.1} parent=1 // pred_check_branch
      %21 = sbr.rel (0) target = $region9
    $region8: #{tpu_custom_call.1} parent=1 // pred_region
      %s23 = ssub.s32 128, 128
      %24 = vsyncadd [#allocation6], %s23
      %s26 = sshll.u32 [#allocation5], 4
      %s27 = int_to_ptr.vmem [resolvable:$true] %s26
      %29 = dma.hbm_to_vmem [thread:$0]  %s1, 128, %s27, [#allocation6]
    $region9: #{tpu_custom_call.1} parent=1 // pred_fallthru
      _
    // Predicated region
    $region10: #{tpu_custom_call.1} parent=1 // pred_check
      _
    $region11: #{tpu_custom_call.1} parent=1 // pred_check_branch
      %31 = sbr.rel (0) target = $region13
    $region12: #{tpu_custom_call.1} parent=1 // pred_region
      %32 = dma.done [#allocation3], 256
    $region13: #{tpu_custom_call.1} parent=1 // pred_fallthru
      _
    // Predicated region
    $region14: #{tpu_custom_call.1} parent=1 // pred_check
      _
    $region15: #{tpu_custom_call.1} parent=1 // pred_check_branch
      %34 = sbr.rel (0) target = $region17
    $region16: #{tpu_custom_call.1} parent=1 // pred_region
      %35 = dma.done [#allocation6], 128
    $region17: #{tpu_custom_call.1} parent=1 // pred_fallthru
      _
    %v36 = vld [vmem:[#allocation2] sm:$0xff]
    %v37 = vld [vmem:[#allocation2 + $0x8] sm:$0xff]
    %v38 = vld [vmem:[#allocation5] sm:$0xff]
    %40 = vset.pattern.permute.xlu0 0
    %41 = vperm.xlu0 %40, %v38
    %v42 = vpop.permute.xlu0 %41
    %v44 = vlaneseq
    %v45 = vshrl.u32 %v44, 7
    %v46 = vsub.s32 0, %v45
    %v47 = vrot.slane %v36, %v46
    %v48 = vlaneseq
    %v49 = vshrl.u32 %v48, 7
    %v50 = vsub.s32 0, %v49
    %v51 = vrot.slane %v37, %v50
    %v52 = vmul.f32 %v42, %v47
    %v53 = vmul.f32 %v42, %v51
    %v54 = vadd.f32 %v52, 0.0
    %v55 = vadd.f32 %v53, 0.0
    %56 = vset.pattern.permute.xlu0 1
    %57 = vperm.xlu0 %56, %v38
    %v58 = vpop.permute.xlu0 %57
    %v60 = vlaneseq
    %v61 = vshrl.u32 %v60, 7
    %v62 = vsub.s32 1, %v61
    %v63 = vrot.slane %v36, %v62
    %v64 = vlaneseq
    %v65 = vshrl.u32 %v64, 7
    %v66 = vsub.s32 1, %v65
    %v67 = vrot.slane %v37, %v66
    %v68 = vmul.f32 %v58, %v63
    %v69 = vmul.f32 %v58, %v67
    %v70 = vadd.f32 %v68, 0.0
    %v71 = vadd.f32 %v69, 0.0
    %72 = vset.pattern.permute.xlu0 2
    %73 = vperm.xlu0 %72, %v38
    %v74 = vpop.permute.xlu0 %73
    %v76 = vlaneseq
    %v77 = vshrl.u32 %v76, 7
    %v78 = vsub.s32 2, %v77
    %v79 = vrot.slane %v36, %v78
    %v80 = vlaneseq
    %v81 = vshrl.u32 %v80, 7
    %v82 = vsub.s32 2, %v81
    %v83 = vrot.slane %v37, %v82
    %v84 = vmul.f32 %v74, %v79
    %v85 = vmul.f32 %v74, %v83
    %v86 = vadd.f32 %v54, %v84
    %v87 = vadd.f32 %v55, %v85
    %88 = vset.pattern.permute.xlu0 3
    %89 = vperm.xlu0 %88, %v38
    %v90 = vpop.permute.xlu0 %89
    %v92 = vlaneseq
    %v93 = vshrl.u32 %v92, 7
    %v94 = vsub.s32 3, %v93
    %v95 = vrot.slane %v36, %v94
    %v96 = vlaneseq
    %v97 = vshrl.u32 %v96, 7
    %v98 = vsub.s32 3, %v97
    %v99 = vrot.slane %v37, %v98
    %v100 = vmul.f32 %v90, %v95
    %v101 = vmul.f32 %v90, %v99
    %v102 = vadd.f32 %v70, %v100
    %v103 = vadd.f32 %v71, %v101
    %v104 = vadd.f32 %v86, %v102
    %v105 = vadd.f32 %v87, %v103
    %106 = vset.pattern.permute.xlu0 4
    %107 = vperm.xlu0 %106, %v38
    %v108 = vpop.permute.xlu0 %107
    %v110 = vadd.f32 %v104, %v108
    %v111 = vadd.f32 %v105, %v108
    %v112 = vmax.f32 %v110, 0.0
    %v113 = vmax.f32 %v111, 0.0
    %114 = vst [vmem:[#allocation7] sm:$0xff] %v112
    %115 = vst [vmem:[#allocation7 + $0x8] sm:$0xff] %v113
    %v116 = vlaneseq
    %v117 = vshrl.u32 %v116, 7
    %v118 = vsub.s32 4, %v117
    %v119 = vrot.slane %v36, %v118
    %v120 = vlaneseq
    %v121 = vshrl.u32 %v120, 7
    %v122 = vsub.s32 4, %v121
    %v123 = vrot.slane %v37, %v122
    %v124 = vmul.f32 %v42, %v119
    %v125 = vmul.f32 %v42, %v123
    %v126 = vadd.f32 %v124, 0.0
    %v127 = vadd.f32 %v125, 0.0
    %v128 = vlaneseq
    %v129 = vshrl.u32 %v128, 7
    %v130 = vsub.s32 5, %v129
    %v131 = vrot.slane %v36, %v130
    %v132 = vlaneseq
    %v133 = vshrl.u32 %v132, 7
    %v134 = vsub.s32 5, %v133
    %v135 = vrot.slane %v37, %v134
    %v136 = vmul.f32 %v58, %v131
    %v137 = vmul.f32 %v58, %v135
    %v138 = vadd.f32 %v136, 0.0
    %v139 = vadd.f32 %v137, 0.0
    %v140 = vlaneseq
    %v141 = vshrl.u32 %v140, 7
    %v142 = vsub.s32 6, %v141
    %v143 = vrot.slane %v36, %v142
    %v144 = vlaneseq
    %v145 = vshrl.u32 %v144, 7
    %v146 = vsub.s32 6, %v145
    %v147 = vrot.slane %v37, %v146
    %v148 = vmul.f32 %v74, %v143
    %v149 = vmul.f32 %v74, %v147
    %v150 = vadd.f32 %v126, %v148
    %v151 = vadd.f32 %v127, %v149
    %v152 = vlaneseq
    %v153 = vshrl.u32 %v152, 7
    %v154 = vsub.s32 7, %v153
    %v155 = vrot.slane %v36, %v154
    %v156 = vlaneseq
    %v157 = vshrl.u32 %v156, 7
    %v158 = vsub.s32 7, %v157
    %v159 = vrot.slane %v37, %v158
    %v160 = vmul.f32 %v90, %v155
    %v161 = vmul.f32 %v90, %v159
    %v162 = vadd.f32 %v138, %v160
    %v163 = vadd.f32 %v139, %v161
    %v164 = vadd.f32 %v150, %v162
    %v165 = vadd.f32 %v151, %v163
    %v166 = vadd.f32 %v164, %v108
    %v167 = vadd.f32 %v165, %v108
    %v168 = vmax.f32 %v166, 0.0
    %v169 = vmax.f32 %v167, 0.0
    %170 = vst [vmem:[#allocation7 + $0x10] sm:$0xff] %v168
    %171 = vst [vmem:[#allocation7 + $0x18] sm:$0xff] %v169
    // Predicated region
    $region18: #{tpu_custom_call.1} parent=1 // pred_check
      _
    $region19: #{tpu_custom_call.1} parent=1 // pred_check_branch
      %173 = sbr.rel (0) target = $region21
    $region20: #{tpu_custom_call.1} parent=1 // pred_region
      %s175 = ssub.s32 512, 512
      %176 = vsyncadd [#allocation4], %s175
      %s177 = sshll.u32 [#allocation7], 4
      %s178 = int_to_ptr.vmem [resolvable:$true] %s177
      %183 = dma.vmem_to_hbm [thread:$0]  %s178, 512, %s2, [#allocation4], 256, 256, 16
    $region21: #{tpu_custom_call.1} parent=1 // pred_fallthru
      _
    // Predicated region
    $region22: #{tpu_custom_call.1} parent=1 // pred_check
      _
    $region23: #{tpu_custom_call.1} parent=1 // pred_check_branch
      %185 = sbr.rel (0) target = $region25
    $region24: #{tpu_custom_call.1} parent=1 // pred_region
      %186 = dma.done [#allocation4], 512
    $region25: #{tpu_custom_call.1} parent=1 // pred_fallthru
      _
    %187 = vsyncpa [#allocation3], 1
    %188 = vsyncpa [#allocation6], 1
    %189 = vsyncpa [#allocation4], 1

</llo_original>
